<compile_context>
chip_gen: v6e
topology: v6e:2x2x1
jax: 0.10.0
libtpu: 0.0.40
codegen_flags: <defaults>
</compile_context>

<pallas_src>
import functools

import jax
import jax.numpy as jnp
from jax import lax
from jax.experimental import pallas as pl
from jax.experimental.pallas import tpu as pltpu

D_MODEL = 768
MAXLEN = 30
N_SEGMENTS = 2
VOCAB_SIZE = 4                               # len({'[PAD]','[CLS]','[SEP]','[MASK]'})
K_TOTAL = VOCAB_SIZE + MAXLEN + N_SEGMENTS   # 36 rows in the fused table
LN_EPS = 1e-5                                # torch.nn.LayerNorm default eps
MAX_ROWS_PER_BLOCK = 512                     # 1.5 MiB f32 out per block; safe on all chips

# LHS-transposed contraction: emb[r, d] = sum_k oh_t[k, r] * table[k, d]
_TN_DIM_NUMBERS = (((0,), (0,)), ((), ()))


def embedding_kernel(x_ref, seg_ref, tbl_ref, gamma_ref, beta_ref, o_ref,
                     *, seq_len, rows_per_block):
    rows = rows_per_block
    row0 = pl.program_id(0) * rows

    tok_row = x_ref[0]        # (1, rows) int32, lane-dense
    seg_row = seg_ref[0]      # (1, rows) int32, lane-dense

    # Positions are data-independent: global flattened row index mod seq_len.
    pos_row = (row0 + lax.broadcasted_iota(jnp.int32, (1, rows), 1)) % seq_len

    # Fused "three-hot", kept transposed as (K_TOTAL, rows) so the lane-dense ids
    # broadcast along sublanes with no relayout.  Ranges in the fused table:
    #   [0, 4)  token rows   [4, 34)  position rows   [34, 36)  segment rows.
    # The bounds masks on tok/seg keep an out-of-range id from aliasing another range.
    kio = lax.broadcasted_iota(jnp.int32, (K_TOTAL, rows), 0)
    oh_t = (((kio == tok_row) & (tok_row >= 0) & (tok_row < VOCAB_SIZE))
            | (kio == pos_row + VOCAB_SIZE)
            | ((kio == seg_row + (VOCAB_SIZE + MAXLEN))
               & (seg_row >= 0) & (seg_row < N_SEGMENTS))).astype(jnp.float32)

    # Single MXU push: (rows, 36) @ (36, 768) expressed as an LHS-transposed contraction.
    emb = lax.dot_general(oh_t, tbl_ref[...],
                          dimension_numbers=_TN_DIM_NUMBERS,
                          preferred_element_type=jnp.float32)   # (rows, D_MODEL) f32

    # LayerNorm over d_model (biased variance, like torch.nn.LayerNorm).
    mean = jnp.mean(emb, axis=-1, keepdims=True)
    centered = emb - mean
    var = jnp.mean(centered * centered, axis=-1, keepdims=True)
    normed = centered * lax.rsqrt(var + LN_EPS)
    o_ref[...] = (normed * gamma_ref[...] + beta_ref[...]).astype(o_ref.dtype)


def _pick_rows_per_block(n, max_rows=MAX_ROWS_PER_BLOCK):
    """Largest multiple-of-8 divisor of n not exceeding max_rows (or n itself if small)."""
    if n <= max_rows:
        return n
    start = max_rows - (max_rows % 8)
    for r in range(start, 7, -8):
        if n % r == 0:
            return r
    return n  # fallback: single block (rare, pathological N)


def bert_embedding(x, seg, tok_table, pos_table, seg_table, gamma, beta,
                   *, rows_per_block=None, out_dtype=jnp.float32):
    B, S = x.shape
    assert S <= MAXLEN, f"seq_len={S} exceeds maxlen={MAXLEN}"
    N = B * S
    rpb = _pick_rows_per_block(N) if rows_per_block is None else rows_per_block
    assert N % rpb == 0, "batch*seq must be a multiple of rows_per_block"
    nb = N // rpb

    # Lane-dense id layout: one (1, rows_per_block) slab per grid step (row-major flatten).
    x_ids = x.reshape(nb, 1, rpb).astype(jnp.int32)
    seg_ids = seg.reshape(nb, 1, rpb).astype(jnp.int32)

    # One fused (36, 768) table: [tok | pos | seg] rows — single gather-matmul in-kernel.
    fused_table = jnp.concatenate(
        [tok_table.astype(jnp.float32),
         pos_table.astype(jnp.float32),
         seg_table.astype(jnp.float32)], axis=0)              # (K_TOTAL, D_MODEL)
    gamma2 = gamma.reshape(1, D_MODEL).astype(jnp.float32)
    beta2 = beta.reshape(1, D_MODEL).astype(jnp.float32)

    kernel = functools.partial(embedding_kernel, seq_len=S, rows_per_block=rpb)

    out = pl.pallas_call(
        kernel,
        out_shape=jax.ShapeDtypeStruct((N, D_MODEL), out_dtype),
        grid_spec=pltpu.PrefetchScalarGridSpec(
            num_scalar_prefetch=0,
            grid=(nb,),
            in_specs=[
                pl.BlockSpec((1, 1, rpb), lambda i: (i, 0, 0)),        # token ids
                pl.BlockSpec((1, 1, rpb), lambda i: (i, 0, 0)),        # segment ids
                pl.BlockSpec((K_TOTAL, D_MODEL), lambda i: (0, 0)),    # fused table (resident)
                pl.BlockSpec((1, D_MODEL), lambda i: (0, 0)),          # gamma (resident)
                pl.BlockSpec((1, D_MODEL), lambda i: (0, 0)),          # beta  (resident)
            ],
            out_specs=pl.BlockSpec((rpb, D_MODEL), lambda i: (i, 0)),
        ),
        compiler_params=pltpu.CompilerParams(
            dimension_semantics=("parallel",)),   # shards grid across v7x's 2 TensorCores
    )(x_ids, seg_ids, fused_table, gamma2, beta2)

    return out.reshape(B, S, D_MODEL)


def reference(x, seg, tok_table, pos_table, seg_table, gamma, beta):
    B, S = x.shape
    pos = jnp.broadcast_to(jnp.arange(S, dtype=jnp.int32)[None, :], (B, S))
    emb = (jnp.take(tok_table, x, axis=0)
           + jnp.take(pos_table, pos, axis=0)
           + jnp.take(seg_table, seg, axis=0))
    mean = jnp.mean(emb, axis=-1, keepdims=True)
    var = jnp.mean((emb - mean) ** 2, axis=-1, keepdims=True)
    return (emb - mean) / jnp.sqrt(var + LN_EPS) * gamma + beta


if __name__ == "__main__":
    key = jax.random.PRNGKey(0)
    k_tok, k_pos, k_seg, k_x, k_s = jax.random.split(key, 5)

    # Parameters (deterministic, matching nn.Embedding N(0,1) and LayerNorm init).
    tok_table = jax.random.normal(k_tok, (VOCAB_SIZE, D_MODEL), jnp.float32)
    pos_table = jax.random.normal(k_pos, (MAXLEN, D_MODEL), jnp.float32)
    seg_table = jax.random.normal(k_seg, (N_SEGMENTS, D_MODEL), jnp.float32)
    gamma = jnp.ones((D_MODEL,), jnp.float32)
    beta = jnp.zeros((D_MODEL,), jnp.float32)

    # Small example inputs: batch=2, seq=8 (<= maxlen=30).
    B, S = 2, 8
    x = jax.random.randint(k_x, (B, S), 0, VOCAB_SIZE, dtype=jnp.int32)
    seg = jax.random.randint(k_s, (B, S), 0, N_SEGMENTS, dtype=jnp.int32)

    out = bert_embedding(x, seg, tok_table, pos_table, seg_table, gamma, beta)
    out = jax.block_until_ready(out)

    ref = reference(x, seg, tok_table, pos_table, seg_table, gamma, beta)
    assert out.shape == (B, S, D_MODEL)
    assert jnp.allclose(out, ref, atol=1e-4, rtol=1e-4), "mismatch vs reference"

    print("KERNEL_OK")
</pallas_src>

<mosaic_0001>
module attributes {stable_mosaic.version = 11 : i64} {
  func.func @embedding_kernel(%arg0: i32, %arg1: memref<1x1x16xi32, #tpu.memory_space<vmem>>, %arg2: memref<1x1x16xi32, #tpu.memory_space<vmem>>, %arg3: memref<36x768xf32, #tpu.memory_space<vmem>>, %arg4: memref<1x768xf32, #tpu.memory_space<vmem>>, %arg5: memref<1x768xf32, #tpu.memory_space<vmem>>, %arg6: memref<16x768xf32, #tpu.memory_space<vmem>>) attributes {dimension_semantics = [#tpu.dimension_semantics<parallel>], iteration_bounds = array<i64: 1>, scalar_prefetch = 0 : i64, scratch_operands = 0 : i64, tpu.core_type = #tpu.core_type<tc>, window_params = [{transform_indices = @transform_0, window_bounds = array<i64: 1, 1, 16>}, {transform_indices = @transform_1, window_bounds = array<i64: 1, 1, 16>}, {pipeline_mode = #tpu.pipeline_mode<synchronous>, transform_indices = @transform_2, window_bounds = array<i64: 36, 768>}, {pipeline_mode = #tpu.pipeline_mode<synchronous>, transform_indices = @transform_3, window_bounds = array<i64: 1, 768>}, {pipeline_mode = #tpu.pipeline_mode<synchronous>, transform_indices = @transform_4, window_bounds = array<i64: 1, 768>}, {transform_indices = @transform_5, window_bounds = array<i64: 16, 768>}]} {
    %c16_i32 = arith.constant 16 : i32
    %0 = arith.muli %arg0, %c16_i32 : i32
    %c0 = arith.constant 0 : index
    %c0_0 = arith.constant 0 : index
    %c0_1 = arith.constant 0 : index
    %1 = vector.load %arg1[%c0, %c0_0, %c0_1] : memref<1x1x16xi32, #tpu.memory_space<vmem>>, vector<1x1x16xi32>
    %2 = vector.shape_cast %1 : vector<1x1x16xi32> to vector<1x16xi32>
    %c0_2 = arith.constant 0 : index
    %c0_3 = arith.constant 0 : index
    %c0_4 = arith.constant 0 : index
    %3 = vector.load %arg2[%c0_2, %c0_3, %c0_4] : memref<1x1x16xi32, #tpu.memory_space<vmem>>, vector<1x1x16xi32>
    %4 = vector.shape_cast %3 : vector<1x1x16xi32> to vector<1x16xi32>
    %5 = tpu.iota {dimensions = array<i32: 1>} : vector<1x16xi32>
    %6 = vector.broadcast %0 : i32 to vector<1x16xi32>
    %7 = arith.addi %6, %5 : vector<1x16xi32>
    %c8_i32 = arith.constant 8 : i32
    %c0_i32 = arith.constant 0 : i32
    %8 = arith.cmpi eq, %c8_i32, %c0_i32 : i32
    %c1_i32 = arith.constant 1 : i32
    %9 = arith.select %8, %c1_i32, %c8_i32 : i32
    %10 = vector.broadcast %9 : i32 to vector<1x16xi32>
    %11 = arith.remsi %7, %10 : vector<1x16xi32>
    %c0_i32_5 = arith.constant 0 : i32
    %12 = vector.broadcast %c0_i32_5 : i32 to vector<1x16xi32>
    %13 = arith.cmpi ne, %11, %12 : vector<1x16xi32>
    %c0_i32_6 = arith.constant 0 : i32
    %14 = vector.broadcast %c0_i32_6 : i32 to vector<1x16xi32>
    %15 = arith.cmpi slt, %11, %14 : vector<1x16xi32>
    %c0_i32_7 = arith.constant 0 : i32
    %16 = arith.cmpi slt, %9, %c0_i32_7 : i32
    %17 = vector.broadcast %16 : i1 to vector<1x16xi1>
    %18 = vector.broadcast %17 : vector<1x16xi1> to vector<1x16xi1>
    %19 = arith.xori %15, %18 : vector<1x16xi1>
    %20 = arith.andi %19, %13 : vector<1x16xi1>
    %21 = vector.broadcast %9 : i32 to vector<1x16xi32>
    %22 = arith.addi %11, %21 : vector<1x16xi32>
    %23 = arith.select %20, %22, %11 : vector<1x16xi1>, vector<1x16xi32>
    %24 = tpu.iota {dimensions = array<i32: 0>} : vector<36x16xi32>
    %25 = vector.broadcast %2 : vector<1x16xi32> to vector<36x16xi32>
    %26 = arith.cmpi eq, %24, %25 : vector<36x16xi32>
    %c0_i32_8 = arith.constant 0 : i32
    %27 = vector.broadcast %c0_i32_8 : i32 to vector<1x16xi32>
    %28 = arith.cmpi sge, %2, %27 : vector<1x16xi32>
    %29 = vector.broadcast %28 : vector<1x16xi1> to vector<36x16xi1>
    %30 = arith.andi %26, %29 : vector<36x16xi1>
    %c4_i32 = arith.constant 4 : i32
    %31 = vector.broadcast %c4_i32 : i32 to vector<1x16xi32>
    %32 = arith.cmpi slt, %2, %31 : vector<1x16xi32>
    %33 = vector.broadcast %32 : vector<1x16xi1> to vector<36x16xi1>
    %34 = arith.andi %30, %33 : vector<36x16xi1>
    %c4_i32_9 = arith.constant 4 : i32
    %35 = vector.broadcast %c4_i32_9 : i32 to vector<1x16xi32>
    %36 = arith.addi %23, %35 : vector<1x16xi32>
    %37 = vector.broadcast %36 : vector<1x16xi32> to vector<36x16xi32>
    %38 = arith.cmpi eq, %24, %37 : vector<36x16xi32>
    %39 = arith.ori %34, %38 : vector<36x16xi1>
    %c34_i32 = arith.constant 34 : i32
    %40 = vector.broadcast %c34_i32 : i32 to vector<1x16xi32>
    %41 = arith.addi %4, %40 : vector<1x16xi32>
    %42 = vector.broadcast %41 : vector<1x16xi32> to vector<36x16xi32>
    %43 = arith.cmpi eq, %24, %42 : vector<36x16xi32>
    %c0_i32_10 = arith.constant 0 : i32
    %44 = vector.broadcast %c0_i32_10 : i32 to vector<1x16xi32>
    %45 = arith.cmpi sge, %4, %44 : vector<1x16xi32>
    %46 = vector.broadcast %45 : vector<1x16xi1> to vector<36x16xi1>
    %47 = arith.andi %43, %46 : vector<36x16xi1>
    %c2_i32 = arith.constant 2 : i32
    %48 = vector.broadcast %c2_i32 : i32 to vector<1x16xi32>
    %49 = arith.cmpi slt, %4, %48 : vector<1x16xi32>
    %50 = vector.broadcast %49 : vector<1x16xi1> to vector<36x16xi1>
    %51 = arith.andi %47, %50 : vector<36x16xi1>
    %52 = arith.ori %39, %51 : vector<36x16xi1>
    %53 = arith.extui %52 : vector<36x16xi1> to vector<36x16xi32>
    %54 = arith.sitofp %53 : vector<36x16xi32> to vector<36x16xf32>
    %c0_11 = arith.constant 0 : index
    %c0_12 = arith.constant 0 : index
    %55 = vector.load %arg3[%c0_11, %c0_12] : memref<36x768xf32, #tpu.memory_space<vmem>>, vector<36x768xf32>
    %cst = arith.constant dense<0.000000e+00> : vector<16x768xf32>
    %56 = tpu.matmul %54, %55, %cst {dimension_numbers = #tpu.dot_dimension_numbers<[0], [0], [1], [1], [0, 1, 1, 1], [], []>} : vector<36x16xf32>, vector<36x768xf32>, vector<16x768xf32> -> vector<16x768xf32>
    %cst_13 = arith.constant dense<0.000000e+00> : vector<16xf32>
    %57 = vector.multi_reduction <add>, %56, %cst_13 [1] : vector<16x768xf32> to vector<16xf32>
    %58 = vector.shape_cast %57 : vector<16xf32> to vector<16x1xf32>
    %cst_14 = arith.constant 7.680000e+02 : f32
    %59 = vector.broadcast %cst_14 : f32 to vector<16x1xf32>
    %60 = arith.divf %58, %59 : vector<16x1xf32>
    %61 = vector.broadcast %60 : vector<16x1xf32> to vector<16x768xf32>
    %62 = arith.subf %56, %61 : vector<16x768xf32>
    %63 = arith.mulf %62, %62 : vector<16x768xf32>
    %cst_15 = arith.constant dense<0.000000e+00> : vector<16xf32>
    %64 = vector.multi_reduction <add>, %63, %cst_15 [1] : vector<16x768xf32> to vector<16xf32>
    %65 = vector.shape_cast %64 : vector<16xf32> to vector<16x1xf32>
    %cst_16 = arith.constant 7.680000e+02 : f32
    %66 = vector.broadcast %cst_16 : f32 to vector<16x1xf32>
    %67 = arith.divf %65, %66 : vector<16x1xf32>
    %cst_17 = arith.constant 9.99999974E-6 : f32
    %68 = vector.broadcast %cst_17 : f32 to vector<16x1xf32>
    %69 = arith.addf %67, %68 : vector<16x1xf32>
    %70 = math.rsqrt %69 : vector<16x1xf32>
    %71 = vector.broadcast %70 : vector<16x1xf32> to vector<16x768xf32>
    %72 = arith.mulf %62, %71 : vector<16x768xf32>
    %c0_18 = arith.constant 0 : index
    %c0_19 = arith.constant 0 : index
    %73 = vector.load %arg4[%c0_18, %c0_19] : memref<1x768xf32, #tpu.memory_space<vmem>>, vector<1x768xf32>
    %74 = vector.broadcast %73 : vector<1x768xf32> to vector<16x768xf32>
    %75 = arith.mulf %72, %74 : vector<16x768xf32>
    %c0_20 = arith.constant 0 : index
    %c0_21 = arith.constant 0 : index
    %76 = vector.load %arg5[%c0_20, %c0_21] : memref<1x768xf32, #tpu.memory_space<vmem>>, vector<1x768xf32>
    %77 = vector.broadcast %76 : vector<1x768xf32> to vector<16x768xf32>
    %78 = arith.addf %75, %77 : vector<16x768xf32>
    %c0_22 = arith.constant 0 : index
    %c0_23 = arith.constant 0 : index
    %79 = vector.load %arg6[%c0_22, %c0_23] : memref<16x768xf32, #tpu.memory_space<vmem>>, vector<16x768xf32>
    tpu.vector_store %arg6[%c0_22, %c0_23], %78 {strides = array<i32>} : memref<16x768xf32, #tpu.memory_space<vmem>>, vector<16x768xf32>,
    return
  }
  func.func @transform_0(%arg0: i32) -> (i32, i32, i32) {
    %c0_i32 = arith.constant 0 : i32
    %c0_i32_0 = arith.constant 0 : i32
    %c0_i32_1 = arith.constant 0 : i32
    return %arg0, %c0_i32, %c0_i32_0 : i32, i32, i32
  }
  func.func @transform_1(%arg0: i32) -> (i32, i32, i32) {
    %c0_i32 = arith.constant 0 : i32
    %c0_i32_0 = arith.constant 0 : i32
    %c0_i32_1 = arith.constant 0 : i32
    return %arg0, %c0_i32, %c0_i32_0 : i32, i32, i32
  }
  func.func @transform_2(%arg0: i32) -> (i32, i32) {
    %c0_i32 = arith.constant 0 : i32
    %c0_i32_0 = arith.constant 0 : i32
    %c0_i32_1 = arith.constant 0 : i32
    return %c0_i32, %c0_i32_0 : i32, i32
  }
  func.func @transform_3(%arg0: i32) -> (i32, i32) {
    %c0_i32 = arith.constant 0 : i32
    %c0_i32_0 = arith.constant 0 : i32
    %c0_i32_1 = arith.constant 0 : i32
    return %c0_i32, %c0_i32_0 : i32, i32
  }
  func.func @transform_4(%arg0: i32) -> (i32, i32) {
    %c0_i32 = arith.constant 0 : i32
    %c0_i32_0 = arith.constant 0 : i32
    %c0_i32_1 = arith.constant 0 : i32
    return %c0_i32, %c0_i32_0 : i32, i32
  }
  func.func @transform_5(%arg0: i32) -> (i32, i32) {
    %c0_i32 = arith.constant 0 : i32
    %c0_i32_0 = arith.constant 0 : i32
    return %arg0, %c0_i32 : i32, i32
  }
}

</mosaic_0001>

<llo_original>
// kernel: tpu_custom_call.1
$region0: #{tpu_custom_call.1}
  #allocation0 [shape = 'u32[]', space=smem, size = 0x4, offset = 0x4, fixed_abs, tag = 'smem constant byte address 0x4 - core index']
  #allocation1 [shape = 'u32[144,128]{1,0:T(1,128)}', space=vmem, size = 0x12000, scoped, tag = 'internal scratch']
  %s0 = inlined_call_operand.hbm [shape: s32[1,1,16], index: 0, kind: input, shape index: {}]
  %s1 = inlined_call_operand.vmem [shape: s32[1,1,16], index: 1, kind: input, shape index: {}]
  %s2 = inlined_call_operand.hbm [shape: f32[36,768], index: 2, kind: input, shape index: {}]
  %s3 = inlined_call_operand.hbm [shape: f32[1,768], index: 3, kind: input, shape index: {}]
  %s4 = inlined_call_operand.vmem [shape: f32[1,768], index: 4, kind: input, shape index: {}]
  %s5 = inlined_call_operand.hbm [shape: f32[16,768], index: 5, kind: output, shape index: {}]
  %s6 = sld [smem:[#allocation0]]
  $region42: #{tpu_custom_call.1} parent=0
    _
  %s8 = ssub.s32 1, %s6
  %s9 = scalar_select 0, %s8, %s6
  $region1: #{tpu_custom_call.1} parent=0
    #allocation2 [shape = 'u8[512]{0}', space=vmem, size = 0x400, scoped, tag = 'input window, operand 0, single buffered']
    #allocation3 [shape = 's32[1]{0}', space=sflag, size = 0x4, scoped, tag = 'scoped memory for tpu_custom_call.1']
    #allocation4 [shape = 's32[1]{0}', space=sflag, size = 0x4, scoped, tag = 'scoped memory for tpu_custom_call.1']
    #allocation5 [shape = 'u8[122880]{0}', space=vmem, size = 0x1e000, scoped, tag = 'input window, operand 2, single buffered']
    #allocation6 [shape = 's32[1]{0}', space=sflag, size = 0x4, scoped, tag = 'scoped memory for tpu_custom_call.1']
    #allocation7 [shape = 'u8[3072]{0}', space=vmem, size = 0xc00, scoped, tag = 'input window, operand 3, single buffered']
    #allocation8 [shape = 'u8[49152]{0}', space=vmem, size = 0xc000, scoped, tag = 'output window, operand 0, single buffered']
    %10 = vsyncpa [#allocation3], 0
    %11 = vsyncpa [#allocation6], 0
    %12 = vsyncpa [#allocation4], 0
    // Predicated region
    $region2: #{tpu_custom_call.1} parent=1 // pred_check
      _
    $region3: #{tpu_custom_call.1} parent=1 // pred_check_branch
      %14 = sbr.rel (0) target = $region5
    $region4: #{tpu_custom_call.1} parent=1 // pred_region
      %s16 = ssub.s32 16, 16
      %17 = vsyncadd [#allocation3], %s16
      %s19 = sshll.u32 [#allocation2], 4
      %s20 = int_to_ptr.vmem [resolvable:$true] %s19
      %22 = dma.hbm_to_vmem [thread:$0]  %s0, 16, %s20, [#allocation3]
    $region5: #{tpu_custom_call.1} parent=1 // pred_fallthru
      _
    // Predicated region
    $region6: #{tpu_custom_call.1} parent=1 // pred_check
      _
    $region7: #{tpu_custom_call.1} parent=1 // pred_check_branch
      %24 = sbr.rel (0) target = $region9
    $region8: #{tpu_custom_call.1} parent=1 // pred_region
      _
    $region9: #{tpu_custom_call.1} parent=1 // pred_fallthru
      _
    // Predicated region
    $region10: #{tpu_custom_call.1} parent=1 // pred_check
      _
    $region11: #{tpu_custom_call.1} parent=1 // pred_check_branch
      %26 = sbr.rel (0) target = $region13
    $region12: #{tpu_custom_call.1} parent=1 // pred_region
      %s28 = ssub.s32 3840, 3840
      %29 = vsyncadd [#allocation6], %s28
      %s30 = sshll.u32 [#allocation5], 4
      %s31 = int_to_ptr.vmem [resolvable:$true] %s30
      %36 = dma.hbm_to_vmem [thread:$0]  %s2, 3840, %s31, [#allocation6], 768, 768, 48
    $region13: #{tpu_custom_call.1} parent=1 // pred_fallthru
      _
    // Predicated region
    $region14: #{tpu_custom_call.1} parent=1 // pred_check
      _
    $region15: #{tpu_custom_call.1} parent=1 // pred_check_branch
      %38 = sbr.rel (0) target = $region17
    $region16: #{tpu_custom_call.1} parent=1 // pred_region
      %s40 = ssub.s32 96, 96
      %41 = vsyncadd [#allocation6], %s40
      %s43 = sshll.u32 [#allocation7], 4
      %s44 = int_to_ptr.vmem [resolvable:$true] %s43
      %46 = dma.hbm_to_vmem [thread:$0]  %s3, 96, %s44, [#allocation6]
    $region17: #{tpu_custom_call.1} parent=1 // pred_fallthru
      _
    // Predicated region
    $region18: #{tpu_custom_call.1} parent=1 // pred_check
      _
    $region19: #{tpu_custom_call.1} parent=1 // pred_check_branch
      %48 = sbr.rel (0) target = $region21
    $region20: #{tpu_custom_call.1} parent=1 // pred_region
      _
    $region21: #{tpu_custom_call.1} parent=1 // pred_fallthru
      _
    // Predicated region
    $region22: #{tpu_custom_call.1} parent=1 // pred_check
      _
    $region23: #{tpu_custom_call.1} parent=1 // pred_check_branch
      %50 = sbr.rel (0) target = $region25
    $region24: #{tpu_custom_call.1} parent=1 // pred_region
      %51 = dma.done [#allocation3], 16
    $region25: #{tpu_custom_call.1} parent=1 // pred_fallthru
      _
    // Predicated region
    $region26: #{tpu_custom_call.1} parent=1 // pred_check
      _
    $region27: #{tpu_custom_call.1} parent=1 // pred_check_branch
      %53 = sbr.rel (0) target = $region29
    $region28: #{tpu_custom_call.1} parent=1 // pred_region
      %54 = dma.done [#allocation6], 3840
    $region29: #{tpu_custom_call.1} parent=1 // pred_fallthru
      _
    // Predicated region
    $region30: #{tpu_custom_call.1} parent=1 // pred_check
      _
    $region31: #{tpu_custom_call.1} parent=1 // pred_check_branch
      %56 = sbr.rel (0) target = $region33
    $region32: #{tpu_custom_call.1} parent=1 // pred_region
      %57 = dma.done [#allocation6], 96
    $region33: #{tpu_custom_call.1} parent=1 // pred_fallthru
      _
    %s58 = smul.u32 0, 16
    %v59 = vld [vmem:[#allocation2] sm:$0x1]
    %v60 = vld [vmem:[%s1] sm:$0x1]
    %v61 = vlaneseq
    %v62 = vand.u32 %v61, 127
    %v63 = vstv %s58
    %v64 = vadd.s32 %v63, %v62
    %vm65 = vcmp.lt.s32.totalorder %v64, 0
    %v66 = vsub.s32 0, %v64
    %v67 = vsel %vm65, %v66, %v64
    %v68 = vshrl.u32 %v67, 3
    %v69 = vand.u32 %v67, 7
    %v70 = vsub.s32 0, %v69
    %v71 = vsel %vm65, %v70, %v69
    %vm72 = vcmp.ne.s32.totalorder %v71, 0
    %vm73 = vcmp.lt.s32.totalorder %v71, 0
    %vm74 = vmand %vm73, %vm72
    %v75 = vadd.s32 %v71, 8
    %v76 = vsel %vm74, %v75, %v71
    %v77 = vlaneseq
    %v78 = vshrl.u32 %v77, 7
    %v79 = vadd.s32 %v78, 8
    %v80 = vadd.s32 %v78, 16
    %v81 = vadd.s32 %v78, 24
    %v82 = vadd.s32 %v78, 32
    %v83 = vlaneseq
    %v84 = vshrl.u32 %v83, 7
    %v85 = vsub.s32 0, %v84
    %v86 = vrot.slane %v59, %v85
    %vm87 = vcmp.eq.s32.totalorder %v78, %v86
    %vm88 = vcmp.eq.s32.totalorder %v79, %v86
    %vm89 = vcmp.eq.s32.totalorder %v80, %v86
    %vm90 = vcmp.eq.s32.totalorder %v81, %v86
    %vm91 = vcmp.eq.s32.totalorder %v82, %v86
    %vm92 = vcmp.ge.s32.totalorder %v59, 0
    %v93 = vsel %vm92, 1, 0
    %v94 = vlaneseq
    %v95 = vshrl.u32 %v94, 7
    %v96 = vsub.s32 0, %v95
    %v97 = vrot.slane %v93, %v96
    %vm98 = vcmp.eq.s32.totalorder %v97, 1
    %vm99 = vmand %vm87, %vm98
    %vm100 = vmand %vm88, %vm98
    %vm101 = vmand %vm89, %vm98
    %vm102 = vmand %vm90, %vm98
    %vm103 = vmand %vm91, %vm98
    %vm104 = vcmp.lt.s32.totalorder %v59, 4
    %v105 = vsel %vm104, 1, 0
    %v106 = vlaneseq
    %v107 = vshrl.u32 %v106, 7
    %v108 = vsub.s32 0, %v107
    %v109 = vrot.slane %v105, %v108
    %vm110 = vcmp.eq.s32.totalorder %v109, 1
    %vm111 = vmand %vm99, %vm110
    %vm112 = vmand %vm100, %vm110
    %vm113 = vmand %vm101, %vm110
    %vm114 = vmand %vm102, %vm110
    %vm115 = vmand %vm103, %vm110
    %v116 = vadd.s32 %v76, 4
    %vm117 = vcmp.eq.s32.totalorder %v78, %v116
    %vm118 = vcmp.eq.s32.totalorder %v79, %v116
    %vm119 = vcmp.eq.s32.totalorder %v80, %v116
    %vm120 = vcmp.eq.s32.totalorder %v81, %v116
    %vm121 = vcmp.eq.s32.totalorder %v82, %v116
    %vm122 = vmor %vm111, %vm117
    %vm123 = vmor %vm112, %vm118
    %vm124 = vmor %vm113, %vm119
    %vm125 = vmor %vm114, %vm120
    %vm126 = vmor %vm115, %vm121
    %v127 = vadd.s32 %v60, 34
    %v128 = vlaneseq
    %v129 = vshrl.u32 %v128, 7
    %v130 = vsub.s32 0, %v129
    %v131 = vrot.slane %v127, %v130
    %vm132 = vcmp.eq.s32.totalorder %v78, %v131
    %vm133 = vcmp.eq.s32.totalorder %v79, %v131
    %vm134 = vcmp.eq.s32.totalorder %v80, %v131
    %vm135 = vcmp.eq.s32.totalorder %v81, %v131
    %vm136 = vcmp.eq.s32.totalorder %v82, %v131
    %vm137 = vcmp.ge.s32.totalorder %v60, 0
    %v138 = vsel %vm137, 1, 0
    %v139 = vlaneseq
    %v140 = vshrl.u32 %v139, 7
    %v141 = vsub.s32 0, %v140
    %v142 = vrot.slane %v138, %v141
    %vm143 = vcmp.eq.s32.totalorder %v142, 1
    %vm144 = vmand %vm132, %vm143
    %vm145 = vmand %vm133, %vm143
    %vm146 = vmand %vm134, %vm143
    %vm147 = vmand %vm135, %vm143
    %vm148 = vmand %vm136, %vm143
    %vm149 = vcmp.lt.s32.totalorder %v60, 2
    %v150 = vsel %vm149, 1, 0
    %v151 = vlaneseq
    %v152 = vshrl.u32 %v151, 7
    %v153 = vsub.s32 0, %v152
    %v154 = vrot.slane %v150, %v153
    %vm155 = vcmp.eq.s32.totalorder %v154, 1
    %vm156 = vmand %vm144, %vm155
    %vm157 = vmand %vm145, %vm155
    %vm158 = vmand %vm146, %vm155
    %vm159 = vmand %vm147, %vm155
    %vm160 = vmand %vm148, %vm155
    %vm161 = vmor %vm122, %vm156
    %vm162 = vmor %vm123, %vm157
    %vm163 = vmor %vm124, %vm158
    %vm164 = vmor %vm125, %vm159
    %vm165 = vmor %vm126, %vm160
    %v166 = vsel %vm161, 1, 0
    %v167 = vsel %vm162, 1, 0
    %v168 = vsel %vm163, 1, 0
    %v169 = vsel %vm164, 1, 0
    %v170 = vsel %vm165, 1, 0
    %v171 = vcvt.s32.f32 %v166
    %v172 = vcvt.s32.f32 %v167
    %v173 = vcvt.s32.f32 %v168
    %v174 = vcvt.s32.f32 %v169
    %v175 = vcvt.s32.f32 %v170
    %v176 = vld [vmem:[#allocation5] sm:$0xff]
    %v177 = vld [vmem:[#allocation5 + $0x8] sm:$0xff]
    %v178 = vld [vmem:[#allocation5 + $0x10] sm:$0xff]
    %v179 = vld [vmem:[#allocation5 + $0x18] sm:$0xff]
    %v180 = vld [vmem:[#allocation5 + $0x20] sm:$0xff]
    %v181 = vld [vmem:[#allocation5 + $0x28] sm:$0xff]
    %v182 = vld [vmem:[#allocation5 + $0x30] sm:$0xff]
    %v183 = vld [vmem:[#allocation5 + $0x38] sm:$0xff]
    %v184 = vld [vmem:[#allocation5 + $0x40] sm:$0xff]
    %v185 = vld [vmem:[#allocation5 + $0x48] sm:$0xff]
    %v186 = vld [vmem:[#allocation5 + $0x50] sm:$0xff]
    %v187 = vld [vmem:[#allocation5 + $0x58] sm:$0xff]
    %v188 = vld [vmem:[#allocation5 + $0x60] sm:$0xff]
    %v189 = vld [vmem:[#allocation5 + $0x68] sm:$0xff]
    %v190 = vld [vmem:[#allocation5 + $0x70] sm:$0xff]
    %v191 = vld [vmem:[#allocation5 + $0x78] sm:$0xff]
    %v192 = vld [vmem:[#allocation5 + $0x80] sm:$0xff]
    %v193 = vld [vmem:[#allocation5 + $0x88] sm:$0xff]
    %v194 = vld [vmem:[#allocation5 + $0x90] sm:$0xff]
    %v195 = vld [vmem:[#allocation5 + $0x98] sm:$0xff]
    %v196 = vld [vmem:[#allocation5 + $0xa0] sm:$0xff]
    %v197 = vld [vmem:[#allocation5 + $0xa8] sm:$0xff]
    %v198 = vld [vmem:[#allocation5 + $0xb0] sm:$0xff]
    %v199 = vld [vmem:[#allocation5 + $0xb8] sm:$0xff]
    %v200 = vld [vmem:[#allocation5 + $0xc0] sm:$0xf]
    %v201 = vld [vmem:[#allocation5 + $0xc8] sm:$0xf]
    %v202 = vld [vmem:[#allocation5 + $0xd0] sm:$0xf]
    %v203 = vld [vmem:[#allocation5 + $0xd8] sm:$0xf]
    %v204 = vld [vmem:[#allocation5 + $0xe0] sm:$0xf]
    %v205 = vld [vmem:[#allocation5 + $0xe8] sm:$0xf]
    %206 = vxpose.xlu0.b32.start [1/16] %v171, 128
    %207 = vxpose.xlu0.b32.cont [2/16] %v172, 128
    %208 = vxpose.xlu0.b32.cont [3/16] %v173, 128
    %209 = vxpose.xlu0.b32.cont [4/16] %v174, 128
    %210 = vxpose.xlu0.b32.cont [5/16] %v175, 128
    %211 = vxpose.xlu0.b32.cont [6/16] 0.0, 128
    %212 = vxpose.xlu0.b32.cont [7/16] 0.0, 128
    %213 = vxpose.xlu0.b32.cont [8/16] 0.0, 128
    %214 = vxpose.xlu0.b32.cont [9/16] 0.0, 128
    %215 = vxpose.xlu0.b32.cont [10/16] 0.0, 128
    %216 = vxpose.xlu0.b32.cont [11/16] 0.0, 128
    %217 = vxpose.xlu0.b32.cont [12/16] 0.0, 128
    %218 = vxpose.xlu0.b32.cont [13/16] 0.0, 128
    %219 = vxpose.xlu0.b32.cont [14/16] 0.0, 128
    %220 = vxpose.xlu0.b32.cont [15/16] 0.0, 128
    %221 = vxpose.xlu0.b32.end [16/16] 0.0, 128
    %v222 = vpop.trf.xlu0
    %v223 = vpop.trf.xlu0
    %v224 = vpop.trf.xlu0
    %v225 = vpop.trf.xlu0
    %v226 = vpop.trf.xlu0
    %v227 = vpop.trf.xlu0
    %v228 = vpop.trf.xlu0
    %v229 = vpop.trf.xlu0
    %v230 = vpop.trf.xlu0
    %v231 = vpop.trf.xlu0
    %v232 = vpop.trf.xlu0
    %v233 = vpop.trf.xlu0
    %v234 = vpop.trf.xlu0
    %v235 = vpop.trf.xlu0
    %v236 = vpop.trf.xlu0
    %v237 = vpop.trf.xlu0
    %vm238 = vcmask 293888
    %v240 = vsel %vm238, %v222, 0
    %v243 = vsel %vm238, %v223, 0
    %vm245 = vcmask 1043456
    %v247 = vsel %vm245, %v200, 0
    %v250 = vsel %vm245, %v201, 0
    %v253 = vsel %vm245, %v202, 0
    %v256 = vsel %vm245, %v203, 0
    %v259 = vsel %vm245, %v204, 0
    %v262 = vsel %vm245, %v205, 0
    %264 = vmatprep.subr.mxu0 0.0
    %265 = vmatpush1.msra.mxu0 0.0
    %266 = vmatprep.subr.mxu0 0.0
    %267 = vmatpush1.msra.mxu0 0.0
    %268 = vmatprep.subr.mxu0 0.0
    %269 = vmatpush1.msra.mxu0 0.0
    %270 = vmatprep.subr.mxu0 0.0
    %271 = vmatpush1.msra.mxu0 0.0
    %272 = vmatprep.subr.mxu0 0.0
    %273 = vmatpush1.msra.mxu0 0.0
    %274 = vmatprep.subr.mxu0 0.0
    %275 = vmatpush1.msra.mxu0 0.0
    %276 = vmatprep.subr.mxu0 0.0
    %277 = vmatpush1.msra.mxu0 0.0
    %278 = vmatprep.subr.mxu0 0.0
    %279 = vmatpush1.msra.mxu0 0.0
    %280 = vmatprep.subr.mxu0 0.0
    %281 = vmatpush1.msra.mxu0 0.0
    %282 = vmatprep.subr.mxu0 0.0
    %283 = vmatpush1.msra.mxu0 0.0
    %284 = vmatprep.subr.mxu0 0.0
    %285 = vmatpush1.msra.mxu0 0.0
    %286 = vmatprep.subr.mxu0 %v250
    %287 = vmatpush1.msra.mxu0 %v247
    %288 = vmatprep.subr.mxu0 %v195
    %289 = vmatpush1.msra.mxu0 %v194
    %290 = vmatprep.subr.mxu0 %v189
    %291 = vmatpush1.msra.mxu0 %v188
    %292 = vmatprep.subr.mxu0 %v183
    %293 = vmatpush1.msra.mxu0 %v182
    %294 = vmatprep.subr.mxu0 %v177
    %295 = vmatpush1.msra.mxu0 %v176
    %296 = vmatprep.subr.mxu0 0.0
    %297 = vmatpush2.msra.mxu0 0.0
    %298 = vmatprep.subr.mxu0 0.0
    %299 = vmatpush2.msra.mxu0 0.0
    %300 = vmatprep.subr.mxu0 0.0
    %301 = vmatpush2.msra.mxu0 0.0
    %302 = vmatprep.subr.mxu0 0.0
    %303 = vmatpush2.msra.mxu0 0.0
    %304 = vmatprep.subr.mxu0 0.0
    %305 = vmatpush2.msra.mxu0 0.0
    %306 = vmatprep.subr.mxu0 0.0
    %307 = vmatpush2.msra.mxu0 0.0
    %308 = vmatprep.subr.mxu0 0.0
    %309 = vmatpush2.msra.mxu0 0.0
    %310 = vmatprep.subr.mxu0 0.0
    %311 = vmatpush2.msra.mxu0 0.0
    %312 = vmatprep.subr.mxu0 0.0
    %313 = vmatpush2.msra.mxu0 0.0
    %314 = vmatprep.subr.mxu0 0.0
    %315 = vmatpush2.msra.mxu0 0.0
    %316 = vmatprep.subr.mxu0 0.0
    %317 = vmatpush2.msra.mxu0 0.0
    %318 = vmatprep.subr.mxu0 0.0
    %319 = vmatpush2.msra.mxu0 0.0
    %320 = vmatprep.subr.mxu0 0.0
    %321 = vmatpush2.msra.mxu0 0.0
    %322 = vmatprep.subr.mxu0 0.0
    %323 = vmatpush2.msra.mxu0 0.0
    %324 = vmatprep.subr.mxu0 0.0
    %325 = vmatpush2.msra.mxu0 0.0
    %326 = vmatprep.subr.mxu0 0.0
    %327 = vmatpush2.msra.mxu0 0.0
    %328 = vmatprep.mubr.f32.mxu0 0.0
    %329 = vmatmul.mubr.f32.gmra.mxu0 %v240
    %v330 = vpop.f32.mrf.mxu0
    %v331 = vadd.f32 0.0, %v330
    %v332 = vpop.f32.mrf.mxu0
    %v333 = vadd.f32 0.0, %v332
    %334 = vmatprep.mubr.f32.mxu0 0.0
    %335 = vmatmul.mubr.f32.gmra.mxu0 %v243
    %v336 = vpop.f32.mrf.mxu0
    %v337 = vadd.f32 0.0, %v336
    %v338 = vpop.f32.mrf.mxu0
    %v339 = vadd.f32 0.0, %v338
    %340 = vdwg.mxu0
    %341 = vmatprep.subr.mxu0 0.0
    %342 = vmatpush1.msra.mxu0 0.0
    %343 = vmatprep.subr.mxu0 0.0
    %344 = vmatpush1.msra.mxu0 0.0
    %345 = vmatprep.subr.mxu0 0.0
    %346 = vmatpush1.msra.mxu0 0.0
    %347 = vmatprep.subr.mxu0 0.0
    %348 = vmatpush1.msra.mxu0 0.0
    %349 = vmatprep.subr.mxu0 0.0
    %350 = vmatpush1.msra.mxu0 0.0
    %351 = vmatprep.subr.mxu0 0.0
    %352 = vmatpush1.msra.mxu0 0.0
    %353 = vmatprep.subr.mxu0 0.0
    %354 = vmatpush1.msra.mxu0 0.0
    %355 = vmatprep.subr.mxu0 0.0
    %356 = vmatpush1.msra.mxu0 0.0
    %357 = vmatprep.subr.mxu0 0.0
    %358 = vmatpush1.msra.mxu0 0.0
    %359 = vmatprep.subr.mxu0 0.0
    %360 = vmatpush1.msra.mxu0 0.0
    %361 = vmatprep.subr.mxu0 0.0
    %362 = vmatpush1.msra.mxu0 0.0
    %363 = vmatprep.subr.mxu0 %v256
    %364 = vmatpush1.msra.mxu0 %v253
    %365 = vmatprep.subr.mxu0 %v197
    %366 = vmatpush1.msra.mxu0 %v196
    %367 = vmatprep.subr.mxu0 %v191
    %368 = vmatpush1.msra.mxu0 %v190
    %369 = vmatprep.subr.mxu0 %v185
    %370 = vmatpush1.msra.mxu0 %v184
    %371 = vmatprep.subr.mxu0 %v179
    %372 = vmatpush1.msra.mxu0 %v178
    %373 = vmatprep.subr.mxu0 0.0
    %374 = vmatpush2.msra.mxu0 0.0
    %375 = vmatprep.subr.mxu0 0.0
    %376 = vmatpush2.msra.mxu0 0.0
    %377 = vmatprep.subr.mxu0 0.0
    %378 = vmatpush2.msra.mxu0 0.0
    %379 = vmatprep.subr.mxu0 0.0
    %380 = vmatpush2.msra.mxu0 0.0
    %381 = vmatprep.subr.mxu0 0.0
    %382 = vmatpush2.msra.mxu0 0.0
    %383 = vmatprep.subr.mxu0 0.0
    %384 = vmatpush2.msra.mxu0 0.0
    %385 = vmatprep.subr.mxu0 0.0
    %386 = vmatpush2.msra.mxu0 0.0
    %387 = vmatprep.subr.mxu0 0.0
    %388 = vmatpush2.msra.mxu0 0.0
    %389 = vmatprep.subr.mxu0 0.0
    %390 = vmatpush2.msra.mxu0 0.0
    %391 = vmatprep.subr.mxu0 0.0
    %392 = vmatpush2.msra.mxu0 0.0
    %393 = vmatprep.subr.mxu0 0.0
    %394 = vmatpush2.msra.mxu0 0.0
    %395 = vmatprep.subr.mxu0 0.0
    %396 = vmatpush2.msra.mxu0 0.0
    %397 = vmatprep.subr.mxu0 0.0
    %398 = vmatpush2.msra.mxu0 0.0
    %399 = vmatprep.subr.mxu0 0.0
    %400 = vmatpush2.msra.mxu0 0.0
    %401 = vmatprep.subr.mxu0 0.0
    %402 = vmatpush2.msra.mxu0 0.0
    %403 = vmatprep.subr.mxu0 0.0
    %404 = vmatpush2.msra.mxu0 0.0
    %405 = vmatprep.mubr.f32.mxu0 0.0
    %406 = vmatmul.mubr.f32.gmra.mxu0 %v240
    %v407 = vpop.f32.mrf.mxu0
    %v408 = vadd.f32 0.0, %v407
    %v409 = vpop.f32.mrf.mxu0
    %v410 = vadd.f32 0.0, %v409
    %411 = vmatprep.mubr.f32.mxu0 0.0
    %412 = vmatmul.mubr.f32.gmra.mxu0 %v243
    %v413 = vpop.f32.mrf.mxu0
    %v414 = vadd.f32 0.0, %v413
    %v415 = vpop.f32.mrf.mxu0
    %v416 = vadd.f32 0.0, %v415
    %417 = vdwg.mxu0
    %418 = vmatprep.subr.mxu0 0.0
    %419 = vmatpush1.msra.mxu0 0.0
    %420 = vmatprep.subr.mxu0 0.0
    %421 = vmatpush1.msra.mxu0 0.0
    %422 = vmatprep.subr.mxu0 0.0
    %423 = vmatpush1.msra.mxu0 0.0
    %424 = vmatprep.subr.mxu0 0.0
    %425 = vmatpush1.msra.mxu0 0.0
    %426 = vmatprep.subr.mxu0 0.0
    %427 = vmatpush1.msra.mxu0 0.0
    %428 = vmatprep.subr.mxu0 0.0
    %429 = vmatpush1.msra.mxu0 0.0
    %430 = vmatprep.subr.mxu0 0.0
    %431 = vmatpush1.msra.mxu0 0.0
    %432 = vmatprep.subr.mxu0 0.0
    %433 = vmatpush1.msra.mxu0 0.0
    %434 = vmatprep.subr.mxu0 0.0
    %435 = vmatpush1.msra.mxu0 0.0
    %436 = vmatprep.subr.mxu0 0.0
    %437 = vmatpush1.msra.mxu0 0.0
    %438 = vmatprep.subr.mxu0 0.0
    %439 = vmatpush1.msra.mxu0 0.0
    %440 = vmatprep.subr.mxu0 %v262
    %441 = vmatpush1.msra.mxu0 %v259
    %442 = vmatprep.subr.mxu0 %v199
    %443 = vmatpush1.msra.mxu0 %v198
    %444 = vmatprep.subr.mxu0 %v193
    %445 = vmatpush1.msra.mxu0 %v192
    %446 = vmatprep.subr.mxu0 %v187
    %447 = vmatpush1.msra.mxu0 %v186
    %448 = vmatprep.subr.mxu0 %v181
    %449 = vmatpush1.msra.mxu0 %v180
    %450 = vmatprep.subr.mxu0 0.0
    %451 = vmatpush2.msra.mxu0 0.0
    %452 = vmatprep.subr.mxu0 0.0
    %453 = vmatpush2.msra.mxu0 0.0
    %454 = vmatprep.subr.mxu0 0.0
    %455 = vmatpush2.msra.mxu0 0.0
    %456 = vmatprep.subr.mxu0 0.0
    %457 = vmatpush2.msra.mxu0 0.0
    %458 = vmatprep.subr.mxu0 0.0
    %459 = vmatpush2.msra.mxu0 0.0
    %460 = vmatprep.subr.mxu0 0.0
    %461 = vmatpush2.msra.mxu0 0.0
    %462 = vmatprep.subr.mxu0 0.0
    %463 = vmatpush2.msra.mxu0 0.0
    %464 = vmatprep.subr.mxu0 0.0
    %465 = vmatpush2.msra.mxu0 0.0
    %466 = vmatprep.subr.mxu0 0.0
    %467 = vmatpush2.msra.mxu0 0.0
    %468 = vmatprep.subr.mxu0 0.0
    %469 = vmatpush2.msra.mxu0 0.0
    %470 = vmatprep.subr.mxu0 0.0
    %471 = vmatpush2.msra.mxu0 0.0
    %472 = vmatprep.subr.mxu0 0.0
    %473 = vmatpush2.msra.mxu0 0.0
    %474 = vmatprep.subr.mxu0 0.0
    %475 = vmatpush2.msra.mxu0 0.0
    %476 = vmatprep.subr.mxu0 0.0
    %477 = vmatpush2.msra.mxu0 0.0
    %478 = vmatprep.subr.mxu0 0.0
    %479 = vmatpush2.msra.mxu0 0.0
    %480 = vmatprep.subr.mxu0 0.0
    %481 = vmatpush2.msra.mxu0 0.0
    %482 = vmatprep.mubr.f32.mxu0 0.0
    %483 = vmatmul.mubr.f32.gmra.mxu0 %v240
    %v484 = vpop.f32.mrf.mxu0
    %v485 = vadd.f32 0.0, %v484
    %v486 = vpop.f32.mrf.mxu0
    %v487 = vadd.f32 0.0, %v486
    %488 = vmatprep.mubr.f32.mxu0 0.0
    %489 = vmatmul.mubr.f32.gmra.mxu0 %v243
    %v490 = vpop.f32.mrf.mxu0
    %v491 = vadd.f32 0.0, %v490
    %v492 = vpop.f32.mrf.mxu0
    %v493 = vadd.f32 0.0, %v492
    %494 = vdwg.mxu0
    %v495 = vadd.f32 %v331, %v333
    %v496 = vadd.f32 %v495, %v408
    %v497 = vadd.f32 %v496, %v410
    %v498 = vadd.f32 %v497, %v485
    %v499 = vadd.f32 %v498, %v487
    %500 = vadd.xlane.f32.xlu0 %v499
    %v501 = vpop.xlane.xlu0 %500
    %v502 = vadd.f32 %v337, %v339
    %v503 = vadd.f32 %v502, %v414
    %v504 = vadd.f32 %v503, %v416
    %v505 = vadd.f32 %v504, %v491
    %v506 = vadd.f32 %v505, %v493
    %507 = vadd.xlane.f32.xlu0 %v506
    %v508 = vpop.xlane.xlu0 %507
    %v509 = vrcp.pop 768.0
    %v510 = vmul.f32 %v501, %v509
    %v511 = vmul.f32 %v508, %v509
    %v512 = vsub.f32 %v331, %v510
    %v513 = vsub.f32 %v333, %v510
    %v514 = vsub.f32 %v408, %v510
    %v515 = vsub.f32 %v410, %v510
    %v516 = vsub.f32 %v485, %v510
    %v517 = vsub.f32 %v487, %v510
    %v518 = vsub.f32 %v337, %v511
    %v519 = vsub.f32 %v339, %v511
    %v520 = vsub.f32 %v414, %v511
    %v521 = vsub.f32 %v416, %v511
    %v522 = vsub.f32 %v491, %v511
    %v523 = vsub.f32 %v493, %v511
    %v524 = vmul.f32 %v512, %v512
    %v525 = vmul.f32 %v513, %v513
    %v526 = vmul.f32 %v514, %v514
    %v527 = vmul.f32 %v515, %v515
    %v528 = vmul.f32 %v516, %v516
    %v529 = vmul.f32 %v517, %v517
    %v530 = vmul.f32 %v518, %v518
    %v531 = vmul.f32 %v519, %v519
    %v532 = vmul.f32 %v520, %v520
    %v533 = vmul.f32 %v521, %v521
    %v534 = vmul.f32 %v522, %v522
    %v535 = vmul.f32 %v523, %v523
    %v536 = vadd.f32 %v524, %v525
    %v537 = vadd.f32 %v536, %v526
    %v538 = vadd.f32 %v537, %v527
    %v539 = vadd.f32 %v538, %v528
    %v540 = vadd.f32 %v539, %v529
    %541 = vadd.xlane.f32.xlu0 %v540
    %v542 = vpop.xlane.xlu0 %541
    %v543 = vadd.f32 %v530, %v531
    %v544 = vadd.f32 %v543, %v532
    %v545 = vadd.f32 %v544, %v533
    %v546 = vadd.f32 %v545, %v534
    %v547 = vadd.f32 %v546, %v535
    %548 = vadd.xlane.f32.xlu0 %v547
    %v549 = vpop.xlane.xlu0 %548
    %v550 = vmul.f32 %v542, %v509
    %v551 = vmul.f32 %v549, %v509
    %v552 = vadd.f32 %v550, 1e-05
    %v553 = vadd.f32 %v551, 1e-05
    %v554 = vrsqrt.pop %v552
    %v555 = vrsqrt.pop %v553
    %v556 = vmul.f32 %v512, %v554
    %v557 = vmul.f32 %v513, %v554
    %v558 = vmul.f32 %v514, %v554
    %v559 = vmul.f32 %v515, %v554
    %v560 = vmul.f32 %v516, %v554
    %v561 = vmul.f32 %v517, %v554
    %v562 = vmul.f32 %v518, %v555
    %v563 = vmul.f32 %v519, %v555
    %v564 = vmul.f32 %v520, %v555
    %v565 = vmul.f32 %v521, %v555
    %v566 = vmul.f32 %v522, %v555
    %v567 = vmul.f32 %v523, %v555
    %v568 = vld [vmem:[#allocation7] sm:$0x3f]
    %v570 = vlaneseq
    %v571 = vshrl.u32 %v570, 7
    %v572 = vsub.s32 0, %v571
    %v573 = vrot.slane %v568, %v572
    %v574 = vlaneseq
    %v575 = vshrl.u32 %v574, 7
    %v576 = vsub.s32 1, %v575
    %v577 = vrot.slane %v568, %v576
    %v578 = vlaneseq
    %v579 = vshrl.u32 %v578, 7
    %v580 = vsub.s32 2, %v579
    %v581 = vrot.slane %v568, %v580
    %v582 = vlaneseq
    %v583 = vshrl.u32 %v582, 7
    %v584 = vsub.s32 3, %v583
    %v585 = vrot.slane %v568, %v584
    %v586 = vlaneseq
    %v587 = vshrl.u32 %v586, 7
    %v588 = vsub.s32 4, %v587
    %v589 = vrot.slane %v568, %v588
    %v590 = vlaneseq
    %v591 = vshrl.u32 %v590, 7
    %v592 = vsub.s32 5, %v591
    %v593 = vrot.slane %v568, %v592
    %v600 = vmul.f32 %v556, %v573
    %v601 = vmul.f32 %v557, %v577
    %v602 = vmul.f32 %v558, %v581
    %v603 = vmul.f32 %v559, %v585
    %v604 = vmul.f32 %v560, %v589
    %v605 = vmul.f32 %v561, %v593
    %v606 = vmul.f32 %v562, %v573
    %v607 = vmul.f32 %v563, %v577
    %v608 = vmul.f32 %v564, %v581
    %v609 = vmul.f32 %v565, %v585
    %v610 = vmul.f32 %v566, %v589
    %v611 = vmul.f32 %v567, %v593
    %v612 = vld [vmem:[%s4] sm:$0x3f]
    %v614 = vlaneseq
    %v615 = vshrl.u32 %v614, 7
    %v616 = vsub.s32 0, %v615
    %v617 = vrot.slane %v612, %v616
    %v618 = vlaneseq
    %v619 = vshrl.u32 %v618, 7
    %v620 = vsub.s32 1, %v619
    %v621 = vrot.slane %v612, %v620
    %v622 = vlaneseq
    %v623 = vshrl.u32 %v622, 7
    %v624 = vsub.s32 2, %v623
    %v625 = vrot.slane %v612, %v624
    %v626 = vlaneseq
    %v627 = vshrl.u32 %v626, 7
    %v628 = vsub.s32 3, %v627
    %v629 = vrot.slane %v612, %v628
    %v630 = vlaneseq
    %v631 = vshrl.u32 %v630, 7
    %v632 = vsub.s32 4, %v631
    %v633 = vrot.slane %v612, %v632
    %v634 = vlaneseq
    %v635 = vshrl.u32 %v634, 7
    %v636 = vsub.s32 5, %v635
    %v637 = vrot.slane %v612, %v636
    %v644 = vadd.f32 %v600, %v617
    %v645 = vadd.f32 %v601, %v621
    %v646 = vadd.f32 %v602, %v625
    %v647 = vadd.f32 %v603, %v629
    %v648 = vadd.f32 %v604, %v633
    %v649 = vadd.f32 %v605, %v637
    %v650 = vadd.f32 %v606, %v617
    %v651 = vadd.f32 %v607, %v621
    %v652 = vadd.f32 %v608, %v625
    %v653 = vadd.f32 %v609, %v629
    %v654 = vadd.f32 %v610, %v633
    %v655 = vadd.f32 %v611, %v637
    %656 = vst [vmem:[#allocation8] sm:$0xff] %v644
    %657 = vst [vmem:[#allocation8 + $0x8] sm:$0xff] %v645
    %658 = vst [vmem:[#allocation8 + $0x10] sm:$0xff] %v646
    %659 = vst [vmem:[#allocation8 + $0x18] sm:$0xff] %v647
    %660 = vst [vmem:[#allocation8 + $0x20] sm:$0xff] %v648
    %661 = vst [vmem:[#allocation8 + $0x28] sm:$0xff] %v649
    %662 = vst [vmem:[#allocation8 + $0x30] sm:$0xff] %v650
    %663 = vst [vmem:[#allocation8 + $0x38] sm:$0xff] %v651
    %664 = vst [vmem:[#allocation8 + $0x40] sm:$0xff] %v652
    %665 = vst [vmem:[#allocation8 + $0x48] sm:$0xff] %v653
    %666 = vst [vmem:[#allocation8 + $0x50] sm:$0xff] %v654
    %667 = vst [vmem:[#allocation8 + $0x58] sm:$0xff] %v655
    // Predicated region
    $region34: #{tpu_custom_call.1} parent=1 // pred_check
      _
    $region35: #{tpu_custom_call.1} parent=1 // pred_check_branch
      %669 = sbr.rel (0) target = $region37
    $region36: #{tpu_custom_call.1} parent=1 // pred_region
      %s671 = ssub.s32 1536, 1536
      %672 = vsyncadd [#allocation4], %s671
      %s673 = sshll.u32 [#allocation8], 4
      %s674 = int_to_ptr.vmem [resolvable:$true] %s673
      %679 = dma.vmem_to_hbm [thread:$0]  %s674, 1536, %s5, [#allocation4], 768, 768, 48
    $region37: #{tpu_custom_call.1} parent=1 // pred_fallthru
      _
    // Predicated region
    $region38: #{tpu_custom_call.1} parent=1 // pred_check
      _
    $region39: #{tpu_custom_call.1} parent=1 // pred_check_branch
      %681 = sbr.rel (0) target = $region41
    $region40: #{tpu_custom_call.1} parent=1 // pred_region
      %682 = dma.done [#allocation4], 1536
    $region41: #{tpu_custom_call.1} parent=1 // pred_fallthru
      _
    %683 = vsyncpa [#allocation3], 1
    %684 = vsyncpa [#allocation6], 1
    %685 = vsyncpa [#allocation4], 1

</llo_original>
